<compile_context>
chip_gen: v7x
topology: tpu7x:2x2x1
jax: 0.10.0
libtpu: 0.0.40
codegen_flags: <defaults>
</compile_context>

<pallas_src>
import functools
import math

import jax
import jax.numpy as jnp
from jax.experimental import pallas as pl
from jax.experimental.pallas import tpu as pltpu


_LANE = 128
_MAX_TILE = 512  # 512x512 bf16 adj tile = 512 KiB; x2 double-buffering fits every gen


def _round_up(x, m):
    return (x + m - 1) // m * m


def _pick_tile(padded_dim):
    # padded_dim is always a multiple of 128; pick the largest friendly divisor.
    for t in (_MAX_TILE, 256, 128):
        if padded_dim % t == 0:
            return t
    return _LANE


def _pad2d(a, rows, cols, dtype=None):
    out = jnp.pad(a, ((0, rows - a.shape[0]), (0, cols - a.shape[1])))
    return out.astype(dtype) if dtype is not None else out


# ----------------------------------------------------------------------------
# Kernel 1: d^{-1/2} = rsqrt(rowsum(adj) + 1)   (the +1 is the self loop of adj+I)
# Tiled reduction over column tiles of adj; output is a lane-1 (N,1) f32 vector.
# ----------------------------------------------------------------------------
def _deg_rsqrt_kernel(adj_ref, out_ref, acc_ref):
    k = pl.program_id(1)

    @pl.when(k == 0)
    def _():
        acc_ref[...] = jnp.full_like(acc_ref, 1.0)  # +1 degree from the self loop

    acc_ref[...] += jnp.sum(adj_ref[...].astype(jnp.float32), axis=1, keepdims=True)

    @pl.when(k == pl.num_programs(1) - 1)
    def _():
        out_ref[...] = jax.lax.rsqrt(acc_ref[...])


def degree_inv_sqrt(adj_p):
    n = adj_p.shape[0]
    tm = _pick_tile(n)
    tk = _pick_tile(n)
    return pl.pallas_call(
        _deg_rsqrt_kernel,
        out_shape=jax.ShapeDtypeStruct((n, 1), jnp.float32),
        grid=(n // tm, n // tk),
        in_specs=[pl.BlockSpec((tm, tk), lambda i, k: (i, k))],
        out_specs=pl.BlockSpec((tm, 1), lambda i, k: (i, 0)),
        scratch_shapes=[pltpu.VMEM((tm, 1), jnp.float32)],
        compiler_params=pltpu.CompilerParams(
            dimension_semantics=("parallel", "arbitrary")),
    )(adj_p)


# ----------------------------------------------------------------------------
# Kernel 2: scaled support  S = D^{-1/2} (x @ W)     (tiled matmul, f32 accumulate)
# ----------------------------------------------------------------------------
def _support_kernel(x_ref, w_ref, d_ref, out_ref, acc_ref):
    k = pl.program_id(2)

    @pl.when(k == 0)
    def _():
        acc_ref[...] = jnp.zeros_like(acc_ref)

    acc_ref[...] += jnp.dot(x_ref[...], w_ref[...], preferred_element_type=jnp.float32)

    @pl.when(k == pl.num_programs(2) - 1)
    def _():
        out_ref[...] = (d_ref[...] * acc_ref[...]).astype(out_ref.dtype)


def scaled_support(x_p, w_p, d_p):
    n, f_in = x_p.shape
    f_out = w_p.shape[1]
    tm = _pick_tile(n)
    tn = _pick_tile(f_out)
    tk = _pick_tile(f_in)
    return pl.pallas_call(
        _support_kernel,
        out_shape=jax.ShapeDtypeStruct((n, f_out), jnp.bfloat16),
        grid=(n // tm, f_out // tn, f_in // tk),
        in_specs=[
            pl.BlockSpec((tm, tk), lambda i, j, k: (i, k)),   # x rows
            pl.BlockSpec((tk, tn), lambda i, j, k: (k, j)),   # W
            pl.BlockSpec((tm, 1), lambda i, j, k: (i, 0)),    # d^{-1/2} rows
        ],
        out_specs=pl.BlockSpec((tm, tn), lambda i, j, k: (i, j)),
        scratch_shapes=[pltpu.VMEM((tm, tn), jnp.float32)],
        compiler_params=pltpu.CompilerParams(
            dimension_semantics=("parallel", "parallel", "arbitrary")),
    )(x_p, w_p, d_p)


# ----------------------------------------------------------------------------
# Kernel 3: aggregation + bias + activation
#   out = D^{-1/2} (adj @ S + S) + b ;  relu  (hidden)  or  log_softmax (output)
# Grid (rows, out-features, reduction over N); f32 accumulator in VMEM.
# The self-loop term S[rows] seeds the accumulator at k == 0.
# ----------------------------------------------------------------------------
def _aggregate_kernel(adj_ref, s_ref, s_self_ref, d_ref, b_ref, out_ref, acc_ref,
                      *, activation, n_valid):
    k = pl.program_id(2)

    @pl.when(k == 0)
    def _():
        # identity (self-loop) contribution of adj_hat = adj + I
        acc_ref[...] = s_self_ref[...].astype(jnp.float32)

    acc_ref[...] += jnp.dot(adj_ref[...], s_ref[...], preferred_element_type=jnp.float32)

    @pl.when(k == pl.num_programs(2) - 1)
    def _():
        out = d_ref[...] * acc_ref[...] + b_ref[...]
        if activation == "relu":
            out = jnp.maximum(out, 0.0)
        elif activation == "log_softmax":
            # mask padded classes; reduction stays inside this (un-tiled) block
            col = jax.lax.broadcasted_iota(jnp.int32, out.shape, 1)
            out = jnp.where(col < n_valid, out, -1e30)
            m = jnp.max(out, axis=1, keepdims=True)
            shifted = out - m
            lse = jnp.log(jnp.sum(jnp.exp(shifted), axis=1, keepdims=True))
            out = shifted - lse
        out_ref[...] = out.astype(out_ref.dtype)


def aggregate(adj_p, s_p, d_p, b_p, *, activation, n_valid, out_dtype):
    n = adj_p.shape[0]
    f_out = s_p.shape[1]
    tm = _pick_tile(n)
    tk = _pick_tile(n)
    # log_softmax reduces over the feature axis -> keep it un-tiled for that layer
    tn = f_out if activation == "log_softmax" else _pick_tile(f_out)
    kernel = functools.partial(_aggregate_kernel, activation=activation, n_valid=n_valid)
    out_itemsize = 4 if out_dtype == jnp.float32 else 2
    cost = pl.CostEstimate(
        flops=2 * n * n * f_out,
        transcendentals=(n * f_out if activation == "log_softmax" else 0),
        bytes_accessed=(n * n * adj_p.dtype.itemsize
                        + 2 * n * f_out * s_p.dtype.itemsize
                        + n * f_out * out_itemsize),
    )
    return pl.pallas_call(
        kernel,
        out_shape=jax.ShapeDtypeStruct((n, f_out), out_dtype),
        grid=(n // tm, f_out // tn, n // tk),
        in_specs=[
            pl.BlockSpec((tm, tk), lambda i, j, k: (i, k)),   # adj row-tile
            pl.BlockSpec((tk, tn), lambda i, j, k: (k, j)),   # scaled support (reduction)
            pl.BlockSpec((tm, tn), lambda i, j, k: (i, j)),   # scaled support (self loop)
            pl.BlockSpec((tm, 1), lambda i, j, k: (i, 0)),    # d^{-1/2} rows
            pl.BlockSpec((1, tn), lambda i, j, k: (0, j)),    # bias
        ],
        out_specs=pl.BlockSpec((tm, tn), lambda i, j, k: (i, j)),
        scratch_shapes=[pltpu.VMEM((tm, tn), jnp.float32)],
        compiler_params=pltpu.CompilerParams(
            dimension_semantics=("parallel", "parallel", "arbitrary")),
        cost_estimate=cost,
    )(adj_p, s_p, s_p, d_p, b_p)


# ----------------------------------------------------------------------------
# Parameter init (mirrors GraphConvolution.reset_parameters: U(-stdv, stdv),
# stdv = 1/sqrt(out_features)).
# ----------------------------------------------------------------------------
def init_gcn_params(key, n_feat, n_hids, n_class):
    layer_units = [n_feat] + list(n_hids) + [n_class]
    params = []
    for idx in range(len(layer_units) - 1):
        fin, fout = layer_units[idx], layer_units[idx + 1]
        stdv = 1.0 / math.sqrt(fout)
        key, kw, kb = jax.random.split(key, 3)
        w = jax.random.uniform(kw, (fin, fout), jnp.float32, -stdv, stdv)
        b = jax.random.uniform(kb, (fout,), jnp.float32, -stdv, stdv)
        params.append((w, b))
    return params


def gcn_forward(x, adj, params, n_class):
    n = x.shape[0]
    n_p = _round_up(n, _LANE)

    adj_p = _pad2d(adj, n_p, n_p, jnp.bfloat16)         # dominant N^2 operand in bf16
    d_p = degree_inv_sqrt(adj_p)                         # (n_p, 1) f32

    f_in = x.shape[1]
    h = _pad2d(x, n_p, _round_up(f_in, _LANE), jnp.bfloat16)

    n_layers = len(params)
    for idx, (w, b) in enumerate(params):
        is_last = idx == n_layers - 1
        fi_p = _round_up(w.shape[0], _LANE)
        fo_p = _round_up(w.shape[1], _LANE)
        w_p = _pad2d(w, fi_p, fo_p, jnp.bfloat16)
        b_p = _pad2d(b.reshape(1, -1), 1, fo_p, jnp.float32)

        s = scaled_support(h, w_p, d_p)                  # bf16 (n_p, fo_p)
        h = aggregate(adj_p, s, d_p, b_p,
                      activation="log_softmax" if is_last else "relu",
                      n_valid=n_class if is_last else fo_p,
                      out_dtype=jnp.float32 if is_last else jnp.bfloat16)
        # TODO(synk): F.dropout training-mode stochastic dropout not reproduced
        # (eval-mode identity).

    return h[:n, :n_class]


# Pure-JAX reference (f32) for a semantics check.
def gcn_reference(x, adj, params):
    n = adj.shape[0]
    adj_hat = adj + jnp.eye(n, dtype=adj.dtype)
    d_inv_sqrt = jax.lax.rsqrt(jnp.sum(adj_hat, axis=1, keepdims=True))
    adj_norm = d_inv_sqrt * adj_hat * d_inv_sqrt.T
    h = x
    for idx, (w, b) in enumerate(params):
        out = adj_norm @ (h @ w) + b.reshape(1, -1)
        if idx < len(params) - 1:
            h = jnp.maximum(out, 0.0)
        else:
            h = jax.nn.log_softmax(out, axis=1)
    return h


if __name__ == "__main__":
    # Small synthetic problem (Cora-like shapes, scaled down): exercises real
    # multi-step grids after padding (N=300 -> 384, feat=200 -> 256).
    N, N_FEAT, N_HIDS, N_CLASS = 300, 200, [96, 64], 7

    key = jax.random.PRNGKey(0)
    key, kx, kadj = jax.random.split(key, 3)

    x = jax.random.normal(kx, (N, N_FEAT), jnp.float32)
    # symmetric 0/1 adjacency with empty diagonal
    a = (jax.random.uniform(kadj, (N, N)) > 0.9).astype(jnp.float32)
    adj = jnp.triu(a, 1)
    adj = adj + adj.T

    params = init_gcn_params(key, N_FEAT, N_HIDS, N_CLASS)

    out = gcn_forward(x, adj, params, N_CLASS)
    out = jax.block_until_ready(out)

    assert out.shape == (N, N_CLASS)
    assert bool(jnp.all(jnp.isfinite(out)))
    # rows of log_softmax should exp-sum to 1
    assert bool(jnp.allclose(jnp.sum(jnp.exp(out), axis=1), 1.0, atol=1e-4))
    # semantics vs. f32 reference (bf16 MXU inputs -> generous tolerance)
    ref = gcn_reference(x, adj, params)
    assert bool(jnp.max(jnp.abs(out - ref)) < 0.2)
    print("KERNEL_OK")
</pallas_src>

<mosaic_0001>
module attributes {stable_mosaic.version = 11 : i64} {
  func.func @_deg_rsqrt_kernel(%arg0: i32, %arg1: i32, %arg2: memref<128x128xbf16, #tpu.memory_space<vmem>>, %arg3: memref<128x1xf32, #tpu.memory_space<vmem>>, %arg4: memref<128x1xf32, #tpu.memory_space<vmem>>) attributes {dimension_semantics = [#tpu.dimension_semantics<parallel>, #tpu.dimension_semantics<arbitrary>], iteration_bounds = array<i64: 3, 3>, scalar_prefetch = 0 : i64, scratch_operands = 1 : i64, tpu.core_type = #tpu.core_type<tc>, window_params = [{transform_indices = @transform_0, window_bounds = array<i64: 128, 128>}, {transform_indices = @transform_1, window_bounds = array<i64: 128, 1>}]} {
    %c0_i32 = arith.constant 0 : i32
    %0 = arith.cmpi eq, %arg1, %c0_i32 : i32
    %1 = arith.extui %0 : i1 to i32
    %c0_i32_0 = arith.constant 0 : i32
    %2 = arith.cmpi ne, %1, %c0_i32_0 : i32
    scf.if %2 {
      %cst_7 = arith.constant 1.000000e+00 : f32
      %13 = vector.broadcast %cst_7 : f32 to vector<128x1xf32>
      %c0_8 = arith.constant 0 : index
      %c0_9 = arith.constant 0 : index
      %14 = vector.load %arg4[%c0_8, %c0_9] : memref<128x1xf32, #tpu.memory_space<vmem>>, vector<128x1xf32>
      tpu.vector_store %arg4[%c0_8, %c0_9], %13 {strides = array<i32>} : memref<128x1xf32, #tpu.memory_space<vmem>>, vector<128x1xf32>,
    } else {
    }
    %c0 = arith.constant 0 : index
    %c0_1 = arith.constant 0 : index
    %3 = vector.load %arg4[%c0, %c0_1] : memref<128x1xf32, #tpu.memory_space<vmem>>, vector<128x1xf32>
    %c0_2 = arith.constant 0 : index
    %c0_3 = arith.constant 0 : index
    %4 = vector.load %arg2[%c0_2, %c0_3] : memref<128x128xbf16, #tpu.memory_space<vmem>>, vector<128x128xbf16>
    %5 = arith.extf %4 : vector<128x128xbf16> to vector<128x128xf32>
    %cst = arith.constant dense<0.000000e+00> : vector<128xf32>
    %6 = vector.multi_reduction <add>, %5, %cst [1] : vector<128x128xf32> to vector<128xf32>
    %7 = vector.shape_cast %6 : vector<128xf32> to vector<128x1xf32>
    %8 = arith.addf %3, %7 : vector<128x1xf32>
    %c0_4 = arith.constant 0 : index
    %c0_5 = arith.constant 0 : index
    %9 = vector.load %arg4[%c0_4, %c0_5] : memref<128x1xf32, #tpu.memory_space<vmem>>, vector<128x1xf32>
    tpu.vector_store %arg4[%c0_4, %c0_5], %8 {strides = array<i32>} : memref<128x1xf32, #tpu.memory_space<vmem>>, vector<128x1xf32>,
    %c2_i32 = arith.constant 2 : i32
    %10 = arith.cmpi eq, %arg1, %c2_i32 : i32
    %11 = arith.extui %10 : i1 to i32
    %c0_i32_6 = arith.constant 0 : i32
    %12 = arith.cmpi ne, %11, %c0_i32_6 : i32
    scf.if %12 {
      %c0_7 = arith.constant 0 : index
      %c0_8 = arith.constant 0 : index
      %13 = vector.load %arg4[%c0_7, %c0_8] : memref<128x1xf32, #tpu.memory_space<vmem>>, vector<128x1xf32>
      %14 = math.rsqrt %13 : vector<128x1xf32>
      %c0_9 = arith.constant 0 : index
      %c0_10 = arith.constant 0 : index
      %15 = vector.load %arg3[%c0_9, %c0_10] : memref<128x1xf32, #tpu.memory_space<vmem>>, vector<128x1xf32>
      tpu.vector_store %arg3[%c0_9, %c0_10], %14 {strides = array<i32>} : memref<128x1xf32, #tpu.memory_space<vmem>>, vector<128x1xf32>,
    } else {
    }
    return
  }
  func.func @transform_0(%arg0: i32, %arg1: i32) -> (i32, i32) {
    %c0_i32 = arith.constant 0 : i32
    return %arg0, %arg1 : i32, i32
  }
  func.func @transform_1(%arg0: i32, %arg1: i32) -> (i32, i32) {
    %c0_i32 = arith.constant 0 : i32
    %c0_i32_0 = arith.constant 0 : i32
    return %arg0, %c0_i32 : i32, i32
  }
}

</mosaic_0001>

<llo_original>
// kernel: tpu_custom_call.1
$region0: #{tpu_custom_call.1}
  #allocation0 [shape = 'u32[]', space=smem, size = 0x4, offset = 0x4, fixed_abs, tag = 'smem constant byte address 0x4 - core index']
  #allocation1 [shape = 'u32[144,128]{1,0:T(1,128)}', space=vmem, size = 0x12000, scoped, tag = 'internal scratch']
  #allocation2 [shape = 'f32[128,1]{1,0:T(8,128)}', space=vmem, size = 0x10000, scoped, tag = 'scratch operand']
  %s0 = inlined_call_operand.hbm [shape: bf16[384,384], index: 0, kind: input, shape index: {}]
  %s1 = inlined_call_operand.vmem [shape: f32[384,1], index: 1, kind: output, shape index: {}]
  %s2 = sld [smem:[#allocation0]]
  $region49: #{tpu_custom_call.1} parent=0
    _
  %s4 = ssub.s32 1, %s2
  %s5 = scalar_select 0, %s4, %s2
  $region1: #{tpu_custom_call.1} parent=0
    #allocation3 [shape = 'u8[65536]{0}', space=vmem, size = 0x10000, scoped, tag = 'input window, operand 0']
    #allocation4 [shape = 's32[2]{0}', space=sflag, size = 0x8, scoped, tag = 'scoped memory for tpu_custom_call.1']
    %6 = vsyncpa [#allocation4], 0
    %s7 = scalar_lea.sflag [#allocation4], 1
    %8 = vsyncpa %s7, 0
    loop: start=0, step=1, limit=11
    $region2: #{tpu_custom_call.1} parent=1 // loop_pre_header
      _
    $region3: #{tpu_custom_call.1} parent=1 // loop_header
      %s10 = sphi 0, %s14
      %p11 = scmp.ge.s32.totalorder %s10, 11
      %s17 = sphi 0, %s29
      %s18 = sphi 0, %s25
      %s19 = sphi 0, %s17
      %s20 = sphi 0, %s18
      %s21 = sphi 0, %s19
      %s22 = sphi 0, %s20
      %s34 = sphi 0, %s36
      %s37 = sphi 0, %s34
      %s38 = sphi 0, %s37
      %s54 = sphi 0, %s38
      %s60 = sphi 0, %s62
      %s63 = sphi 0, %s60
      %s64 = sphi 0, %s63
      %s80 = sphi 0, %s64
    $region4: #{tpu_custom_call.1} parent=1 // loop_header_branch
      %13 = sbr.rel (%p11) target = $region8
    $region5: #{tpu_custom_call.1} parent=1 // loop_body
      %s15 = ssub.s32 %s10, 1
      %s16 = ssub.s32 %s10, 2
      %s23 = sadd.s32 1, %s18
      %p24 = scmp.ge.s32.totalorder %s23, 3
      %s25 = scalar_select %p24, 0, %s23
      %s26 = sadd.s32 1, %s17
      %s27 = scalar_select %p24, %s26, %s17
      %p28 = scmp.ge.s32.totalorder %s27, 3
      %s29 = scalar_select %p28, 0, %s27
      %s30 = ssub.s32 %s17, %s29
      %s31 = ssub.s32 %s18, %s25
      %s32 = sor.u32 %s30, %s31
      %p33 = scmp.eq.s32.totalorder %s32, 0
      %s35 = sadd.s32 %s34, 1
      %s36 = scalar_select %p33, %s34, %s35
      %p39 = pneg %p33
      %p40 = scmp.eq.s32.totalorder %s10, 8
      %p41 = por %p39, %p40
      %p42 = scmp.ne.s32.totalorder %s34, %s37
      %p43 = scmp.eq.s32.totalorder %s10, 0
      %p44 = por %p42, %p43
      %p45 = scmp.ne.s32.totalorder %s34, %s37
      %p46 = scmp.eq.s32.totalorder %s15, 8
      %p47 = por %p45, %p46
      %p48 = scmp.ne.s32.totalorder %s37, %s38
      %p49 = scmp.eq.s32.totalorder %s15, 0
      %p50 = por %p48, %p49
      %p51 = scmp.ne.s32.totalorder %s37, %s38
      %p52 = scmp.eq.s32.totalorder %s16, 8
      %p53 = por %p51, %p52
      %p55 = scmp.ne.s32.totalorder %s38, %s54
      %p56 = scmp.eq.s32.totalorder %s16, 0
      %p57 = por %p55, %p56
      %s58 = ssub.s32 %s17, %s29
      %p59 = scmp.eq.s32.totalorder %s58, 0
      %s61 = sadd.s32 %s60, 1
      %s62 = scalar_select %p59, %s60, %s61
      %p65 = pneg %p59
      %p66 = scmp.eq.s32.totalorder %s10, 8
      %p67 = por %p65, %p66
      %p68 = scmp.ne.s32.totalorder %s60, %s63
      %p69 = scmp.eq.s32.totalorder %s10, 0
      %p70 = por %p68, %p69
      %p71 = scmp.ne.s32.totalorder %s60, %s63
      %p72 = scmp.eq.s32.totalorder %s15, 8
      %p73 = por %p71, %p72
      %p74 = scmp.ne.s32.totalorder %s63, %s64
      %p75 = scmp.eq.s32.totalorder %s15, 0
      %p76 = por %p74, %p75
      %p77 = scmp.ne.s32.totalorder %s63, %s64
      %p78 = scmp.eq.s32.totalorder %s16, 8
      %p79 = por %p77, %p78
      %p81 = scmp.ne.s32.totalorder %s64, %s80
      %p82 = scmp.eq.s32.totalorder %s16, 0
      %p83 = por %p81, %p82
      %p84 = scmp.le.s32.totalorder 1, %s10
      %p85 = scmp.lt.s32.totalorder %s10, 10
      %p86 = pnand %p84, %p85
      %p87 = pneg %p86
      // Predicated region
      $region9: #{tpu_custom_call.1} parent=5 // pred_check
        _
      $region10: #{tpu_custom_call.1} parent=5 // pred_check_branch
        %89 = sbr.rel (%p86) target = $region12
      $region11: #{tpu_custom_call.1} parent=5 // pred_region
        %s90 = ssub.s32 %s10, 1
      $region12: #{tpu_custom_call.1} parent=5 // pred_fallthru
        _
      %p91 = scmp.lt.s32.totalorder %s10, 9
      // Predicated region
      $region13: #{tpu_custom_call.1} parent=5 // pred_check
        %p92 = pneg %p91
      $region14: #{tpu_custom_call.1} parent=5 // pred_check_branch
        %94 = sbr.rel (%p92) target = $region16
      $region15: #{tpu_custom_call.1} parent=5 // pred_region
        // Predicated region
        $region17: #{tpu_custom_call.1} parent=15 // pred_check
          %p95 = pneg %p44
        $region18: #{tpu_custom_call.1} parent=15 // pred_check_branch
          %97 = sbr.rel (%p95) target = $region20
        $region19: #{tpu_custom_call.1} parent=15 // pred_region
          %s98 = sand.u32 %s34, 1
          %s99 = scalar_lea.sflag [#allocation4], %s98
          %s100 = sand.u32 %s34, 1
          %s101 = smul.addr %s100, 64
          %s102 = scalar_lea.vmem [#allocation3], %s101
          %s103 = smul.u32 16, %s17
          %s105 = ssub.s32 1024, 1024
          %106 = vsyncadd %s99, %s105
          %s107 = smul.addr %s103, 3
          %s108 = sadd.s32 %s18, %s107
          %s109 = smul.addr %s108, 64
          %s110 = scalar_lea.hbm %s0, %s109
          %s111 = sshll.u32 %s102, 4
          %s112 = int_to_ptr.vmem [resolvable:$true] %s111
          %117 = dma.hbm_to_vmem [thread:$0]  %s110, 1024, %s112, %s99, 192, 64, 4
        $region20: #{tpu_custom_call.1} parent=15 // pred_fallthru
          _
      $region16: #{tpu_custom_call.1} parent=5 // pred_fallthru
        _
      %p118 = scmp.le.s32.totalorder 1, %s10
      %p119 = scmp.lt.s32.totalorder %s10, 10
      %p120 = pnand %p118, %p119
      %p121 = pneg %p120
      // Predicated region
      $region21: #{tpu_custom_call.1} parent=5 // pred_check
        _
      $region22: #{tpu_custom_call.1} parent=5 // pred_check_branch
        %123 = sbr.rel (%p120) target = $region24
      $region23: #{tpu_custom_call.1} parent=5 // pred_region
        %s124 = ssub.s32 %s10, 1
        %s125 = sand.u32 %s37, 1
        %s126 = scalar_lea.sflag [#allocation4], %s125
        %s127 = sand.u32 %s37, 1
        %s128 = smul.addr %s127, 64
        %s129 = scalar_lea.vmem [#allocation3], %s128
        // Predicated region
        $region25: #{tpu_custom_call.1} parent=23 // pred_check
          %p130 = pneg %p50
        $region26: #{tpu_custom_call.1} parent=23 // pred_check_branch
          %132 = sbr.rel (%p130) target = $region28
        $region27: #{tpu_custom_call.1} parent=23 // pred_region
          %133 = dma.done %s126, 1024
        $region28: #{tpu_custom_call.1} parent=23 // pred_fallthru
          _
        %s134 = sand.u32 %s37, 1
        %s135 = scalar_lea.sflag [#allocation4], %s134
        %s136 = sand.u32 %s37, 1
        %s137 = smul.addr %s136, 64
        %s138 = scalar_lea.vmem [#allocation3], %s137
        %p139 = pneg %p50
        %p140 = pneg %p47
        %p141 = pneg %p76
        %p142 = pneg %p73
        %s143 = smul.u32 16, %s19
        %p144 = scmp.lt.s32.totalorder %s143, 47
        %s145 = scalar_select %p144, %s143, 47
        %s146 = smul.addr %s145, 8
        %s147 = scalar_lea.vmem %s1, %s146
        %s148 = smul.u32 16, %s19
        %s149 = smul.u32 16, %s19
        %p150 = scmp.lt.s32.totalorder %s149, 47
        %s151 = scalar_select %p150, %s149, 47
        %s152 = smul.addr %s151, 8
        %s153 = scalar_lea.vmem %s1, %s152
        %s154 = smul.u32 16, %s19
        %p155 = scmp.eq.s32.totalorder %s20, 0
        // Predicated region
        $region29: #{tpu_custom_call.1} parent=23 // pred_check
          %p156 = pneg %p155
        $region30: #{tpu_custom_call.1} parent=23 // pred_check_branch
          %158 = sbr.rel (%p156) target = $region32
        $region31: #{tpu_custom_call.1} parent=23 // pred_region
          %vm159 = vcmask 7168
          %160 = vst.msk [vmem:[#allocation2] sm:$0xff] %vm159, 1.0
          %161 = vst.msk [vmem:[#allocation2 + $0x8] sm:$0xff] %vm159, 1.0
          %162 = vst.msk [vmem:[#allocation2 + $0x10] sm:$0xff] %vm159, 1.0
          %163 = vst.msk [vmem:[#allocation2 + $0x18] sm:$0xff] %vm159, 1.0
          %164 = vst.msk [vmem:[#allocation2 + $0x20] sm:$0xff] %vm159, 1.0
          %165 = vst.msk [vmem:[#allocation2 + $0x28] sm:$0xff] %vm159, 1.0
          %166 = vst.msk [vmem:[#allocation2 + $0x30] sm:$0xff] %vm159, 1.0
          %167 = vst.msk [vmem:[#allocation2 + $0x38] sm:$0xff] %vm159, 1.0
          %168 = vst.msk [vmem:[#allocation2 + $0x40] sm:$0xff] %vm159, 1.0
          %169 = vst.msk [vmem:[#allocation2 + $0x48] sm:$0xff] %vm159, 1.0
          %170 = vst.msk [vmem:[#allocation2 + $0x50] sm:$0xff] %vm159, 1.0
          %171 = vst.msk [vmem:[#allocation2 + $0x58] sm:$0xff] %vm159, 1.0
          %172 = vst.msk [vmem:[#allocation2 + $0x60] sm:$0xff] %vm159, 1.0
          %173 = vst.msk [vmem:[#allocation2 + $0x68] sm:$0xff] %vm159, 1.0
          %174 = vst.msk [vmem:[#allocation2 + $0x70] sm:$0xff] %vm159, 1.0
          %175 = vst.msk [vmem:[#allocation2 + $0x78] sm:$0xff] %vm159, 1.0
        $region32: #{tpu_custom_call.1} parent=23 // pred_fallthru
          _
        %v176 = vld [vmem:[#allocation2] sm:$0xff]
        %v177 = vld [vmem:[#allocation2 + $0x8] sm:$0xff]
        %v178 = vld [vmem:[#allocation2 + $0x10] sm:$0xff]
        %v179 = vld [vmem:[#allocation2 + $0x18] sm:$0xff]
        %v180 = vld [vmem:[#allocation2 + $0x20] sm:$0xff]
        %v181 = vld [vmem:[#allocation2 + $0x28] sm:$0xff]
        %v182 = vld [vmem:[#allocation2 + $0x30] sm:$0xff]
        %v183 = vld [vmem:[#allocation2 + $0x38] sm:$0xff]
        %v184 = vld [vmem:[#allocation2 + $0x40] sm:$0xff]
        %v185 = vld [vmem:[#allocation2 + $0x48] sm:$0xff]
        %v186 = vld [vmem:[#allocation2 + $0x50] sm:$0xff]
        %v187 = vld [vmem:[#allocation2 + $0x58] sm:$0xff]
        %v188 = vld [vmem:[#allocation2 + $0x60] sm:$0xff]
        %v189 = vld [vmem:[#allocation2 + $0x68] sm:$0xff]
        %v190 = vld [vmem:[#allocation2 + $0x70] sm:$0xff]
        %v191 = vld [vmem:[#allocation2 + $0x78] sm:$0xff]
        %v192 = vld [vmem:[%s129] sm:$0xf]
        %v193 = vld [vmem:[%s129 + $0x4] sm:$0xf]
        %v194 = vld [vmem:[%s129 + $0x8] sm:$0xf]
        %v195 = vld [vmem:[%s129 + $0xc] sm:$0xf]
        %v196 = vld [vmem:[%s129 + $0x10] sm:$0xf]
        %v197 = vld [vmem:[%s129 + $0x14] sm:$0xf]
        %v198 = vld [vmem:[%s129 + $0x18] sm:$0xf]
        %v199 = vld [vmem:[%s129 + $0x1c] sm:$0xf]
        %v200 = vld [vmem:[%s129 + $0x20] sm:$0xf]
        %v201 = vld [vmem:[%s129 + $0x24] sm:$0xf]
        %v202 = vld [vmem:[%s129 + $0x28] sm:$0xf]
        %v203 = vld [vmem:[%s129 + $0x2c] sm:$0xf]
        %v204 = vld [vmem:[%s129 + $0x30] sm:$0xf]
        %v205 = vld [vmem:[%s129 + $0x34] sm:$0xf]
        %v206 = vld [vmem:[%s129 + $0x38] sm:$0xf]
        %v207 = vld [vmem:[%s129 + $0x3c] sm:$0xf]
        %v208 = vunpack.c.l.bf16 %v192
        %v209 = vunpack.c.l.bf16 %v193
        %v210 = vunpack.c.l.bf16 %v194
        %v211 = vunpack.c.l.bf16 %v195
        %v212 = vunpack.c.l.bf16 %v196
        %v213 = vunpack.c.l.bf16 %v197
        %v214 = vunpack.c.l.bf16 %v198
        %v215 = vunpack.c.l.bf16 %v199
        %v216 = vunpack.c.l.bf16 %v200
        %v217 = vunpack.c.l.bf16 %v201
        %v218 = vunpack.c.l.bf16 %v202
        %v219 = vunpack.c.l.bf16 %v203
        %v220 = vunpack.c.l.bf16 %v204
        %v221 = vunpack.c.l.bf16 %v205
        %v222 = vunpack.c.l.bf16 %v206
        %v223 = vunpack.c.l.bf16 %v207
        %224 = vadd.xlane.f32.xlu0 %v208
        %v225 = vpop.xlane.xlu0 %224
        %226 = vadd.xlane.f32.xlu0 %v209
        %v227 = vpop.xlane.xlu0 %226
        %228 = vadd.xlane.f32.xlu0 %v210
        %v229 = vpop.xlane.xlu0 %228
        %230 = vadd.xlane.f32.xlu0 %v211
        %v231 = vpop.xlane.xlu0 %230
        %232 = vadd.xlane.f32.xlu0 %v212
        %v233 = vpop.xlane.xlu0 %232
        %234 = vadd.xlane.f32.xlu0 %v213
        %v235 = vpop.xlane.xlu0 %234
        %236 = vadd.xlane.f32.xlu0 %v214
        %v237 = vpop.xlane.xlu0 %236
        %238 = vadd.xlane.f32.xlu0 %v215
        %v239 = vpop.xlane.xlu0 %238
        %240 = vadd.xlane.f32.xlu0 %v216
        %v241 = vpop.xlane.xlu0 %240
        %242 = vadd.xlane.f32.xlu0 %v217
        %v243 = vpop.xlane.xlu0 %242
        %244 = vadd.xlane.f32.xlu0 %v218
        %v245 = vpop.xlane.xlu0 %244
        %246 = vadd.xlane.f32.xlu0 %v219
        %v247 = vpop.xlane.xlu0 %246
        %248 = vadd.xlane.f32.xlu0 %v220
        %v249 = vpop.xlane.xlu0 %248
        %250 = vadd.xlane.f32.xlu0 %v221
        %v251 = vpop.xlane.xlu0 %250
        %252 = vadd.xlane.f32.xlu0 %v222
        %v253 = vpop.xlane.xlu0 %252
        %254 = vadd.xlane.f32.xlu0 %v223
        %v255 = vpop.xlane.xlu0 %254
        %v256 = vadd.f32 %v176, %v225
        %v257 = vadd.f32 %v177, %v227
        %v258 = vadd.f32 %v178, %v229
        %v259 = vadd.f32 %v179, %v231
        %v260 = vadd.f32 %v180, %v233
        %v261 = vadd.f32 %v181, %v235
        %v262 = vadd.f32 %v182, %v237
        %v263 = vadd.f32 %v183, %v239
        %v264 = vadd.f32 %v184, %v241
        %v265 = vadd.f32 %v185, %v243
        %v266 = vadd.f32 %v186, %v245
        %v267 = vadd.f32 %v187, %v247
        %v268 = vadd.f32 %v188, %v249
        %v269 = vadd.f32 %v189, %v251
        %v270 = vadd.f32 %v190, %v253
        %v271 = vadd.f32 %v191, %v255
        %vm272 = vcmask 7168
        %273 = vst.msk [vmem:[#allocation2] sm:$0xff] %vm272, %v256
        %274 = vst.msk [vmem:[#allocation2 + $0x8] sm:$0xff] %vm272, %v257
        %275 = vst.msk [vmem:[#allocation2 + $0x10] sm:$0xff] %vm272, %v258
        %276 = vst.msk [vmem:[#allocation2 + $0x18] sm:$0xff] %vm272, %v259
        %277 = vst.msk [vmem:[#allocation2 + $0x20] sm:$0xff] %vm272, %v260
        %278 = vst.msk [vmem:[#allocation2 + $0x28] sm:$0xff] %vm272, %v261
        %279 = vst.msk [vmem:[#allocation2 + $0x30] sm:$0xff] %vm272, %v262
        %280 = vst.msk [vmem:[#allocation2 + $0x38] sm:$0xff] %vm272, %v263
        %281 = vst.msk [vmem:[#allocation2 + $0x40] sm:$0xff] %vm272, %v264
        %282 = vst.msk [vmem:[#allocation2 + $0x48] sm:$0xff] %vm272, %v265
        %283 = vst.msk [vmem:[#allocation2 + $0x50] sm:$0xff] %vm272, %v266
        %284 = vst.msk [vmem:[#allocation2 + $0x58] sm:$0xff] %vm272, %v267
        %285 = vst.msk [vmem:[#allocation2 + $0x60] sm:$0xff] %vm272, %v268
        %286 = vst.msk [vmem:[#allocation2 + $0x68] sm:$0xff] %vm272, %v269
        %287 = vst.msk [vmem:[#allocation2 + $0x70] sm:$0xff] %vm272, %v270
        %288 = vst.msk [vmem:[#allocation2 + $0x78] sm:$0xff] %vm272, %v271
        %p289 = scmp.eq.s32.totalorder %s20, 2
        // Predicated region
        $region33: #{tpu_custom_call.1} parent=23 // pred_check
          %p290 = pneg %p289
        $region34: #{tpu_custom_call.1} parent=23 // pred_check_branch
          %292 = sbr.rel (%p290) target = $region36
        $region35: #{tpu_custom_call.1} parent=23 // pred_region
          %v293 = vld [vmem:[#allocation2] sm:$0xff]
          %v294 = vld [vmem:[#allocation2 + $0x8] sm:$0xff]
          %v295 = vld [vmem:[#allocation2 + $0x10] sm:$0xff]
          %v296 = vld [vmem:[#allocation2 + $0x18] sm:$0xff]
          %v297 = vld [vmem:[#allocation2 + $0x20] sm:$0xff]
          %v298 = vld [vmem:[#allocation2 + $0x28] sm:$0xff]
          %v299 = vld [vmem:[#allocation2 + $0x30] sm:$0xff]
          %v300 = vld [vmem:[#allocation2 + $0x38] sm:$0xff]
          %v301 = vld [vmem:[#allocation2 + $0x40] sm:$0xff]
          %v302 = vld [vmem:[#allocation2 + $0x48] sm:$0xff]
          %v303 = vld [vmem:[#allocation2 + $0x50] sm:$0xff]
          %v304 = vld [vmem:[#allocation2 + $0x58] sm:$0xff]
          %v305 = vld [vmem:[#allocation2 + $0x60] sm:$0xff]
          %v306 = vld [vmem:[#allocation2 + $0x68] sm:$0xff]
          %v307 = vld [vmem:[#allocation2 + $0x70] sm:$0xff]
          %v308 = vld [vmem:[#allocation2 + $0x78] sm:$0xff]
          %v309 = vrsqrt.pop %v293
          %v310 = vrsqrt.pop %v294
          %v311 = vrsqrt.pop %v295
          %v312 = vrsqrt.pop %v296
          %v313 = vrsqrt.pop %v297
          %v314 = vrsqrt.pop %v298
          %v315 = vrsqrt.pop %v299
          %v316 = vrsqrt.pop %v300
          %v317 = vrsqrt.pop %v301
          %v318 = vrsqrt.pop %v302
          %v319 = vrsqrt.pop %v303
          %v320 = vrsqrt.pop %v304
          %v321 = vrsqrt.pop %v305
          %v322 = vrsqrt.pop %v306
          %v323 = vrsqrt.pop %v307
          %v324 = vrsqrt.pop %v308
          %325 = vst.msk [vmem:[%s153] sm:$0xff] %vm272, %v309
          %326 = vst.msk [vmem:[%s153 + $0x8] sm:$0xff] %vm272, %v310
          %327 = vst.msk [vmem:[%s153 + $0x10] sm:$0xff] %vm272, %v311
          %328 = vst.msk [vmem:[%s153 + $0x18] sm:$0xff] %vm272, %v312
          %329 = vst.msk [vmem:[%s153 + $0x20] sm:$0xff] %vm272, %v313
          %330 = vst.msk [vmem:[%s153 + $0x28] sm:$0xff] %vm272, %v314
          %331 = vst.msk [vmem:[%s153 + $0x30] sm:$0xff] %vm272, %v315
          %332 = vst.msk [vmem:[%s153 + $0x38] sm:$0xff] %vm272, %v316
          %333 = vst.msk [vmem:[%s153 + $0x40] sm:$0xff] %vm272, %v317
          %334 = vst.msk [vmem:[%s153 + $0x48] sm:$0xff] %vm272, %v318
          %335 = vst.msk [vmem:[%s153 + $0x50] sm:$0xff] %vm272, %v319
          %336 = vst.msk [vmem:[%s153 + $0x58] sm:$0xff] %vm272, %v320
          %337 = vst.msk [vmem:[%s153 + $0x60] sm:$0xff] %vm272, %v321
          %338 = vst.msk [vmem:[%s153 + $0x68] sm:$0xff] %vm272, %v322
          %339 = vst.msk [vmem:[%s153 + $0x70] sm:$0xff] %vm272, %v323
          %340 = vst.msk [vmem:[%s153 + $0x78] sm:$0xff] %vm272, %v324
        $region36: #{tpu_custom_call.1} parent=23 // pred_fallthru
          _
        %s341 = smul.u32 16, %s19
        %p342 = scmp.lt.s32.totalorder %s341, 47
        %s343 = scalar_select %p342, %s341, 47
        %s344 = smul.addr %s343, 8
        %s345 = scalar_lea.vmem %s1, %s344
        // Predicated region
        $region37: #{tpu_custom_call.1} parent=23 // pred_check
          %p346 = pneg %p73
        $region38: #{tpu_custom_call.1} parent=23 // pred_check_branch
          %348 = sbr.rel (%p346) target = $region40
        $region39: #{tpu_custom_call.1} parent=23 // pred_region
          %s349 = smul.u32 16, %s19
        $region40: #{tpu_custom_call.1} parent=23 // pred_fallthru
          _
      $region24: #{tpu_custom_call.1} parent=5 // pred_fallthru
        _
      %p350 = scmp.le.s32.totalorder 2, %s10
      // Predicated region
      $region41: #{tpu_custom_call.1} parent=5 // pred_check
        %p351 = pneg %p350
      $region42: #{tpu_custom_call.1} parent=5 // pred_check_branch
        %353 = sbr.rel (%p351) target = $region44
      $region43: #{tpu_custom_call.1} parent=5 // pred_region
        %s354 = ssub.s32 %s10, 2
        // Predicated region
        $region45: #{tpu_custom_call.1} parent=43 // pred_check
          %p355 = pneg %p79
        $region46: #{tpu_custom_call.1} parent=43 // pred_check_branch
          %357 = sbr.rel (%p355) target = $region48
        $region47: #{tpu_custom_call.1} parent=43 // pred_region
          %s358 = smul.u32 16, %s21
          %p359 = scmp.lt.s32.totalorder %s358, 47
          %s360 = scalar_select %p359, %s358, 47
          %s361 = smul.addr %s360, 8
          %s362 = scalar_lea.vmem %s1, %s361
        $region48: #{tpu_custom_call.1} parent=43 // pred_fallthru
          _
      $region44: #{tpu_custom_call.1} parent=5 // pred_fallthru
        _
    $region6: #{tpu_custom_call.1} parent=1 // loop_footer
      %s14 = sadd.s32 1, %s10
    $region7: #{tpu_custom_call.1} parent=1 // loop_footer_branch
      %9 = sbr.rel target = $region3
    $region8: #{tpu_custom_call.1} parent=1 // loop_exit
      _
    %363 = vsyncpa [#allocation4], 1
    %s364 = scalar_lea.sflag [#allocation4], 1
    %365 = vsyncpa %s364, 1

</llo_original>
